<compile_context>
chip_gen: v5e
topology: v5e:2x2
jax: 0.10.0
libtpu: 0.0.40
codegen_flags: <defaults>
</compile_context>

<pallas_src>
import functools

import jax
import jax.numpy as jnp
import numpy as np
from jax.experimental import pallas as pl
from jax.experimental.pallas import tpu as pltpu


def _get_sinusoid_encoding_table(n_position: int, d_hid: int) -> np.ndarray:
    """Reproduces PositionalEncoding._get_sinusoid_encoding_table exactly."""
    positions = np.arange(n_position, dtype=np.float64)[:, None]          # (P, 1)
    hid = np.arange(d_hid)
    denom = np.power(10000.0, 2 * (hid // 2) / d_hid)[None, :]            # (1, D)
    table = positions / denom                                             # (P, D)
    table[:, 0::2] = np.sin(table[:, 0::2])
    table[:, 1::2] = np.cos(table[:, 1::2])
    return table.astype(np.float32)                                       # (P, D)


def _pos_add_kernel(x_ref, pos_ref, o_ref):
    # x_ref / o_ref: (tR, tC) tile of the flattened (B, S*D) input / output.
    # pos_ref:       (1, tC) slice of the flattened positional table; the
    #                (1, tC) + (tR, tC) add broadcasts over rows for free
    #                (VPU handles it, no materialized broadcast).
    o_ref[...] = x_ref[...] + pos_ref[...]


def _round_down(x: int, m: int) -> int:
    return (x // m) * m


def _choose_tiles(n_rows: int, n_cols: int, itemsize: int):
    """~2 MiB lane-dense blocks; (8, 128)-legal for any (n_rows, n_cols)."""
    target_elems = (2 * 1024 * 1024) // itemsize

    if n_cols >= 128:
        # Lane dim: multiple of 128, capped so one block is ~2 MiB at 8 rows.
        cand_c = max(128, _round_down(target_elems // 8, 128))
        full_c = n_cols if n_cols % 128 == 0 else _round_down(n_cols, 128)
        tc = min(full_c, cand_c)
    else:
        tc = n_cols                       # < 128: block must equal full dim

    if n_rows >= 8:
        cand_r = max(8, _round_down(max(target_elems // tc, 8), 8))
        tr = min(_round_down(n_rows, 8), cand_r)
    else:
        tr = n_rows                       # < 8: block must equal full dim

    return tr, tc


@functools.partial(jax.jit, static_argnames=("n_position",))
def positional_encoding(x: jnp.ndarray, n_position: int = 256) -> jnp.ndarray:
    """x: (B, S, D). Returns x + pos_table[:, :S, :] (same dtype as x)."""
    B, S, D = x.shape
    if S > n_position:
        raise ValueError(f"sequence length {S} exceeds n_position {n_position}")

    # Built in numpy at trace time (S, D, n_position are static) -> constant.
    pos = jnp.asarray(
        _get_sinusoid_encoding_table(n_position, D)[:S, :], dtype=x.dtype
    )                                                                      # (S, D)

    # Flatten to a lane-dense 2-D layout: rows = batch, cols = S*D.
    L = S * D
    x2 = x.reshape(B, L)
    pos2 = pos.reshape(1, L)

    tr, tc = _choose_tiles(B, L, jnp.dtype(x.dtype).itemsize)
    grid = (pl.cdiv(B, tr), pl.cdiv(L, tc))

    out2 = pl.pallas_call(
        _pos_add_kernel,
        out_shape=jax.ShapeDtypeStruct((B, L), x.dtype),
        grid=grid,
        in_specs=[
            pl.BlockSpec((tr, tc), lambda r, c: (r, c)),
            pl.BlockSpec((1, tc), lambda r, c: (0, c)),
        ],
        out_specs=pl.BlockSpec((tr, tc), lambda r, c: (r, c)),
        compiler_params=pltpu.CompilerParams(
            dimension_semantics=("parallel", "parallel"),
        ),
    )(x2, pos2)

    return out2.reshape(B, S, D)


def _reference(x: jnp.ndarray, n_position: int = 256) -> jnp.ndarray:
    pos = jnp.asarray(
        _get_sinusoid_encoding_table(n_position, x.shape[-1]), dtype=x.dtype
    )
    return x + pos[None, : x.shape[1], :]


if __name__ == "__main__":
    key = jax.random.PRNGKey(0)
    B, S, D = 2, 8, 32
    x = jax.random.normal(key, (B, S, D), dtype=jnp.float32)

    out = positional_encoding(x)
    out = jax.block_until_ready(out)

    ref = _reference(x)
    np.testing.assert_allclose(np.asarray(out), np.asarray(ref), rtol=1e-6, atol=1e-6)

    print("KERNEL_OK")
</pallas_src>

<mosaic_0001>
module attributes {stable_mosaic.version = 11 : i64} {
  func.func @_pos_add_kernel(%arg0: i32, %arg1: i32, %arg2: memref<2x256xf32, #tpu.memory_space<vmem>>, %arg3: memref<1x256xf32, #tpu.memory_space<vmem>>, %arg4: memref<2x256xf32, #tpu.memory_space<vmem>>) attributes {dimension_semantics = [#tpu.dimension_semantics<parallel>, #tpu.dimension_semantics<parallel>], iteration_bounds = array<i64: 1, 1>, scalar_prefetch = 0 : i64, scratch_operands = 0 : i64, tpu.core_type = #tpu.core_type<tc>, window_params = [{transform_indices = @transform_0, window_bounds = array<i64: 2, 256>}, {transform_indices = @transform_1, window_bounds = array<i64: 1, 256>}, {transform_indices = @transform_2, window_bounds = array<i64: 2, 256>}]} {
    %c0 = arith.constant 0 : index
    %c0_0 = arith.constant 0 : index
    %0 = vector.load %arg2[%c0, %c0_0] : memref<2x256xf32, #tpu.memory_space<vmem>>, vector<2x256xf32>
    %c0_1 = arith.constant 0 : index
    %c0_2 = arith.constant 0 : index
    %1 = vector.load %arg3[%c0_1, %c0_2] : memref<1x256xf32, #tpu.memory_space<vmem>>, vector<1x256xf32>
    %2 = vector.broadcast %1 : vector<1x256xf32> to vector<2x256xf32>
    %3 = arith.addf %0, %2 : vector<2x256xf32>
    %c0_3 = arith.constant 0 : index
    %c0_4 = arith.constant 0 : index
    %4 = vector.load %arg4[%c0_3, %c0_4] : memref<2x256xf32, #tpu.memory_space<vmem>>, vector<2x256xf32>
    tpu.vector_store %arg4[%c0_3, %c0_4], %3 {strides = array<i32>} : memref<2x256xf32, #tpu.memory_space<vmem>>, vector<2x256xf32>,
    return
  }
  func.func @transform_0(%arg0: i32, %arg1: i32) -> (i32, i32) {
    %c0_i32 = arith.constant 0 : i32
    return %arg0, %arg1 : i32, i32
  }
  func.func @transform_1(%arg0: i32, %arg1: i32) -> (i32, i32) {
    %c0_i32 = arith.constant 0 : i32
    %c0_i32_0 = arith.constant 0 : i32
    return %c0_i32, %arg1 : i32, i32
  }
  func.func @transform_2(%arg0: i32, %arg1: i32) -> (i32, i32) {
    %c0_i32 = arith.constant 0 : i32
    return %arg0, %arg1 : i32, i32
  }
}

</mosaic_0001>

<llo_original>
// kernel: positional_encoding.1
$region0: #{positional_encoding.1}
  #allocation0 [shape = 'u32[]', space=smem, size = 0x4, offset = 0x4, fixed_abs, tag = 'smem constant byte address 0x4 - core index']
  #allocation1 [shape = 'u32[72,128]{1,0:T(1,128)}', space=vmem, size = 0x9000, scoped, tag = 'internal scratch']
  %s0 = inlined_call_operand.vmem [shape: f32[2,256], index: 0, kind: input, shape index: {}]
  %s1 = inlined_call_operand.vmem [shape: f32[1,256], index: 1, kind: input, shape index: {}]
  %s2 = inlined_call_operand.vmem [shape: f32[2,256], index: 2, kind: output, shape index: {}]
  %s3 = sld [smem:[#allocation0]]
  $region18: #{positional_encoding.1} parent=0
    _
  %s5 = ssub.s32 1, %s3
  %s6 = scalar_select 0, %s5, %s3
  // Predicated region
  $region2: #{positional_encoding.1} parent=0 // pred_check
    _
  $region3: #{positional_encoding.1} parent=0 // pred_check_branch
    %8 = sbr.rel (0) target = $region5
  $region4: #{positional_encoding.1} parent=0 // pred_region
    _
  $region5: #{positional_encoding.1} parent=0 // pred_fallthru
    _
  // Predicated region
  $region6: #{positional_encoding.1} parent=0 // pred_check
    _
  $region7: #{positional_encoding.1} parent=0 // pred_check_branch
    %10 = sbr.rel (0) target = $region9
  $region8: #{positional_encoding.1} parent=0 // pred_region
    _
  $region9: #{positional_encoding.1} parent=0 // pred_fallthru
    _
  %v11 = vld [vmem:[%s0] sm:$0xf]
  %v12 = vld [vmem:[%s1] sm:$0x3]
  %v14 = vperm.slane %v12, 0
  %v15 = vperm.slane %v12, 1
  %v16 = vrot.slane %v15, 6
  %vm17 = vcmask 1041408
  %v18 = vsel %vm17, %v14, %v16
  %v20 = vadd.f32 %v11, %v18
  %21 = vst [vmem:[%s2] sm:$0xf] %v20
  // Predicated region
  $region10: #{positional_encoding.1} parent=0 // pred_check
    _
  $region11: #{positional_encoding.1} parent=0 // pred_check_branch
    %23 = sbr.rel (0) target = $region13
  $region12: #{positional_encoding.1} parent=0 // pred_region
    _
  $region13: #{positional_encoding.1} parent=0 // pred_fallthru
    _
  // Predicated region
  $region14: #{positional_encoding.1} parent=0 // pred_check
    _
  $region15: #{positional_encoding.1} parent=0 // pred_check_branch
    %25 = sbr.rel (0) target = $region17
  $region16: #{positional_encoding.1} parent=0 // pred_region
    _
  $region17: #{positional_encoding.1} parent=0 // pred_fallthru
    _

</llo_original>
